<compile_context>
chip_gen: v6e
topology: v6e:2x2x1
jax: 0.10.0
libtpu: 0.0.40
codegen_flags: <defaults>
</compile_context>

<pallas_src>
import functools

import jax
import jax.numpy as jnp
from jax.experimental import pallas as pl
from jax.experimental.pallas import tpu as pltpu


def _value_net_kernel(xT_ref, w1t_ref, b1t_ref, w2t_ref, b2t_ref,
                      w3t_ref, b3t_ref, o_ref):
    xT = xT_ref[...]                      # (in_dims, block_b), f32 or bf16
    act_dtype = xT.dtype                  # bf16 on v6e/v7x, f32 on v5e

    # fc1 + tanh (f32 MXU accumulation; activation in act_dtype)
    h = jnp.dot(w1t_ref[...], xT, preferred_element_type=jnp.float32)
    h = jnp.tanh((h + b1t_ref[...]).astype(act_dtype))
    # fc2 + tanh
    h = jnp.dot(w2t_ref[...], h, preferred_element_type=jnp.float32)
    h = jnp.tanh((h + b2t_ref[...]).astype(act_dtype))
    # fc3 + LeakyReLU (torch.nn.LeakyReLU default negative_slope = 0.01)
    out = jnp.dot(w3t_ref[...], h, preferred_element_type=jnp.float32)
    out = out + b3t_ref[...]
    out = jnp.where(out > 0, out, 0.01 * out)
    o_ref[...] = out.astype(o_ref.dtype)  # (out_dims, block_b), lane-dense


@functools.partial(jax.jit, static_argnames=("block_b", "use_bf16"))
def _value_network_forward_impl(x, params, *, block_b, use_bf16):
    w1, b1, w2, b2, w3, b3 = params
    B, in_dims = x.shape
    out_dims = w3.shape[1]
    op_dtype = jnp.bfloat16 if use_bf16 else jnp.float32

    # Layout plumbing (outside the kernel): feature-major operands,
    # reduced-precision matmul operands where the chip supports it.
    xT = x.astype(op_dtype).T             # (in_dims, B)
    w1t = w1.T.astype(op_dtype)           # (64, in_dims)
    w2t = w2.T.astype(op_dtype)           # (64, 64)
    w3t = w3.T.astype(op_dtype)           # (out_dims, 64)
    b1t, b2t, b3t = b1.T, b2.T, b3.T      # (64,1), (64,1), (out_dims,1) f32

    grid = (pl.cdiv(B, block_b),)
    const = lambda arr: pl.BlockSpec(arr.shape, lambda i: (0, 0))

    outT = pl.pallas_call(
        _value_net_kernel,
        out_shape=jax.ShapeDtypeStruct((out_dims, B), jnp.float32),
        grid_spec=pltpu.PrefetchScalarGridSpec(
            num_scalar_prefetch=0,
            grid=grid,
            in_specs=[
                pl.BlockSpec((in_dims, block_b), lambda i: (0, i)),  # x^T tile
                const(w1t), const(b1t),
                const(w2t), const(b2t),
                const(w3t), const(b3t),
            ],
            out_specs=pl.BlockSpec((out_dims, block_b), lambda i: (0, i)),
        ),
        compiler_params=pltpu.CompilerParams(
            dimension_semantics=("parallel",)),
    )(xT, w1t, b1t, w2t, b2t, w3t, b3t)

    return outT.T                          # (B, out_dims) f32


def _bf16_supported():
    """bf16 VPU/EUP path only on v6e / v7x; keep f32 on v5e and older."""
    try:
        kind = jax.devices()[0].device_kind.lower()
    except Exception:
        return False
    return ("v6" in kind) or ("v7" in kind)


def value_network_forward(x, params, *, block_b=None, use_bf16=None):
    """Forward pass of ValueNetwork. x: (B, input_dims) float32."""
    if use_bf16 is None:
        use_bf16 = _bf16_supported()
    B = x.shape[0]
    if block_b is None:
        # Tiny-batch path: one grid step, no pipelining churn.  Larger
        # batches: 256-row (lane-axis) tiles -> big DMAs, low step overhead,
        # bounded vreg pressure.
        block_b = B if B <= 256 else 256
    return _value_network_forward_impl(x, params, block_b=block_b,
                                       use_bf16=use_bf16)


def init_value_network_params(key, input_dims, output_dims):
    """Deterministic init mimicking torch.nn.Linear's U(-1/sqrt(fan_in), ...)."""
    def linear(key, fan_in, fan_out):
        kw, kb = jax.random.split(key)
        bound = 1.0 / jnp.sqrt(fan_in)
        w = jax.random.uniform(kw, (fan_in, fan_out), jnp.float32, -bound, bound)
        b = jax.random.uniform(kb, (1, fan_out), jnp.float32, -bound, bound)
        return w, b

    k1, k2, k3 = jax.random.split(key, 3)
    w1, b1 = linear(k1, input_dims, 64)
    w2, b2 = linear(k2, 64, 64)
    w3, b3 = linear(k3, 64, output_dims)
    return (w1, b1, w2, b2, w3, b3)


def _reference_forward(x, params):
    w1, b1, w2, b2, w3, b3 = params
    h = jnp.tanh(x @ w1 + b1)
    h = jnp.tanh(h @ w2 + b2)
    o = h @ w3 + b3
    return jnp.where(o > 0, o, 0.01 * o)


# TODO(synk): the optimizer / MSE loss / training loop (optimize, normalize)
# are host-side training utilities, not part of the forward pass kernel.


if __name__ == "__main__":
    key = jax.random.PRNGKey(0)
    k_param, k_x, k_x2 = jax.random.split(key, 3)

    input_dims = 16
    output_dims = 1
    batch = 16

    params = init_value_network_params(k_param, input_dims, output_dims)

    bf16 = _bf16_supported()
    atol = 3e-2 if bf16 else 1e-5
    rtol = 5e-2 if bf16 else 1e-5

    # Small, latency-style batch (single grid step).
    x = jax.random.normal(k_x, (batch, input_dims), jnp.float32)
    out = jax.block_until_ready(value_network_forward(x, params))
    ref = _reference_forward(x, params)
    assert out.shape == (batch, output_dims), out.shape
    assert jnp.allclose(out, ref, atol=atol, rtol=rtol), "mismatch (small batch)"

    # Larger batch exercising the tiled (multi-step, parallel) grid path.
    big_batch = 512
    x2 = jax.random.normal(k_x2, (big_batch, input_dims), jnp.float32)
    out2 = jax.block_until_ready(value_network_forward(x2, params))
    ref2 = _reference_forward(x2, params)
    assert out2.shape == (big_batch, output_dims), out2.shape
    assert jnp.allclose(out2, ref2, atol=atol, rtol=rtol), "mismatch (big batch)"

    print("KERNEL_OK")
</pallas_src>

<mosaic_0001>
module attributes {stable_mosaic.version = 11 : i64} {
  func.func @_value_net_kernel(%arg0: i32, %arg1: memref<16x16xf32, #tpu.memory_space<vmem>>, %arg2: memref<64x16xf32, #tpu.memory_space<vmem>>, %arg3: memref<64x1xf32, #tpu.memory_space<vmem>>, %arg4: memref<64x64xf32, #tpu.memory_space<vmem>>, %arg5: memref<64x1xf32, #tpu.memory_space<vmem>>, %arg6: memref<1x64xf32, #tpu.memory_space<vmem>>, %arg7: memref<1x1xf32, #tpu.memory_space<vmem>>, %arg8: memref<1x16xf32, #tpu.memory_space<vmem>>) attributes {dimension_semantics = [#tpu.dimension_semantics<parallel>], iteration_bounds = array<i64: 1>, scalar_prefetch = 0 : i64, scratch_operands = 0 : i64, tpu.core_type = #tpu.core_type<tc>, window_params = [{transform_indices = @transform_0, window_bounds = array<i64: 16, 16>}, {pipeline_mode = #tpu.pipeline_mode<synchronous>, transform_indices = @transform_1, window_bounds = array<i64: 64, 16>}, {pipeline_mode = #tpu.pipeline_mode<synchronous>, transform_indices = @transform_2, window_bounds = array<i64: 64, 1>}, {pipeline_mode = #tpu.pipeline_mode<synchronous>, transform_indices = @transform_3, window_bounds = array<i64: 64, 64>}, {pipeline_mode = #tpu.pipeline_mode<synchronous>, transform_indices = @transform_4, window_bounds = array<i64: 64, 1>}, {pipeline_mode = #tpu.pipeline_mode<synchronous>, transform_indices = @transform_5, window_bounds = array<i64: 1, 64>}, {pipeline_mode = #tpu.pipeline_mode<synchronous>, transform_indices = @transform_6, window_bounds = array<i64: 1, 1>}, {transform_indices = @transform_7, window_bounds = array<i64: 1, 16>}]} {
    %c0 = arith.constant 0 : index
    %c0_0 = arith.constant 0 : index
    %0 = vector.load %arg1[%c0, %c0_0] : memref<16x16xf32, #tpu.memory_space<vmem>>, vector<16x16xf32>
    %c0_1 = arith.constant 0 : index
    %c0_2 = arith.constant 0 : index
    %1 = vector.load %arg2[%c0_1, %c0_2] : memref<64x16xf32, #tpu.memory_space<vmem>>, vector<64x16xf32>
    %cst = arith.constant dense<0.000000e+00> : vector<64x16xf32>
    %2 = tpu.matmul %1, %0, %cst {dimension_numbers = #tpu.dot_dimension_numbers<[1], [0], [0], [1], [0, 0, 1, 1], [], []>} : vector<64x16xf32>, vector<16x16xf32>, vector<64x16xf32> -> vector<64x16xf32>
    %c0_3 = arith.constant 0 : index
    %c0_4 = arith.constant 0 : index
    %3 = vector.load %arg3[%c0_3, %c0_4] : memref<64x1xf32, #tpu.memory_space<vmem>>, vector<64x1xf32>
    %4 = vector.broadcast %3 : vector<64x1xf32> to vector<64x16xf32>
    %5 = arith.addf %2, %4 : vector<64x16xf32>
    %6 = math.tanh %5 : vector<64x16xf32>
    %c0_5 = arith.constant 0 : index
    %c0_6 = arith.constant 0 : index
    %7 = vector.load %arg4[%c0_5, %c0_6] : memref<64x64xf32, #tpu.memory_space<vmem>>, vector<64x64xf32>
    %cst_7 = arith.constant dense<0.000000e+00> : vector<64x16xf32>
    %8 = tpu.matmul %7, %6, %cst_7 {dimension_numbers = #tpu.dot_dimension_numbers<[1], [0], [0], [1], [0, 0, 1, 1], [], []>} : vector<64x64xf32>, vector<64x16xf32>, vector<64x16xf32> -> vector<64x16xf32>
    %c0_8 = arith.constant 0 : index
    %c0_9 = arith.constant 0 : index
    %9 = vector.load %arg5[%c0_8, %c0_9] : memref<64x1xf32, #tpu.memory_space<vmem>>, vector<64x1xf32>
    %10 = vector.broadcast %9 : vector<64x1xf32> to vector<64x16xf32>
    %11 = arith.addf %8, %10 : vector<64x16xf32>
    %12 = math.tanh %11 : vector<64x16xf32>
    %c0_10 = arith.constant 0 : index
    %c0_11 = arith.constant 0 : index
    %13 = vector.load %arg6[%c0_10, %c0_11] : memref<1x64xf32, #tpu.memory_space<vmem>>, vector<1x64xf32>
    %cst_12 = arith.constant dense<0.000000e+00> : vector<1x16xf32>
    %14 = tpu.matmul %13, %12, %cst_12 {dimension_numbers = #tpu.dot_dimension_numbers<[1], [0], [0], [1], [0, 0, 1, 1], [], []>} : vector<1x64xf32>, vector<64x16xf32>, vector<1x16xf32> -> vector<1x16xf32>
    %c0_13 = arith.constant 0 : index
    %c0_14 = arith.constant 0 : index
    %15 = vector.load %arg7[%c0_13, %c0_14] : memref<1x1xf32, #tpu.memory_space<vmem>>, vector<1x1xf32>
    %16 = vector.broadcast %15 : vector<1x1xf32> to vector<1x16xf32>
    %17 = arith.addf %14, %16 : vector<1x16xf32>
    %cst_15 = arith.constant 0.000000e+00 : f32
    %18 = vector.broadcast %cst_15 : f32 to vector<1x16xf32>
    %19 = arith.cmpf ogt, %17, %18 : vector<1x16xf32>
    %cst_16 = arith.constant 0.00999999977 : f32
    %20 = vector.broadcast %cst_16 : f32 to vector<1x16xf32>
    %21 = arith.mulf %20, %17 : vector<1x16xf32>
    %22 = arith.select %19, %17, %21 : vector<1x16xi1>, vector<1x16xf32>
    %c0_17 = arith.constant 0 : index
    %c0_18 = arith.constant 0 : index
    %23 = vector.load %arg8[%c0_17, %c0_18] : memref<1x16xf32, #tpu.memory_space<vmem>>, vector<1x16xf32>
    tpu.vector_store %arg8[%c0_17, %c0_18], %22 {strides = array<i32>} : memref<1x16xf32, #tpu.memory_space<vmem>>, vector<1x16xf32>,
    return
  }
  func.func @transform_0(%arg0: i32) -> (i32, i32) {
    %c0_i32 = arith.constant 0 : i32
    %c0_i32_0 = arith.constant 0 : i32
    return %c0_i32, %arg0 : i32, i32
  }
  func.func @transform_1(%arg0: i32) -> (i32, i32) {
    %c0_i32 = arith.constant 0 : i32
    %c0_i32_0 = arith.constant 0 : i32
    %c0_i32_1 = arith.constant 0 : i32
    return %c0_i32, %c0_i32_0 : i32, i32
  }
  func.func @transform_2(%arg0: i32) -> (i32, i32) {
    %c0_i32 = arith.constant 0 : i32
    %c0_i32_0 = arith.constant 0 : i32
    %c0_i32_1 = arith.constant 0 : i32
    return %c0_i32, %c0_i32_0 : i32, i32
  }
  func.func @transform_3(%arg0: i32) -> (i32, i32) {
    %c0_i32 = arith.constant 0 : i32
    %c0_i32_0 = arith.constant 0 : i32
    %c0_i32_1 = arith.constant 0 : i32
    return %c0_i32, %c0_i32_0 : i32, i32
  }
  func.func @transform_4(%arg0: i32) -> (i32, i32) {
    %c0_i32 = arith.constant 0 : i32
    %c0_i32_0 = arith.constant 0 : i32
    %c0_i32_1 = arith.constant 0 : i32
    return %c0_i32, %c0_i32_0 : i32, i32
  }
  func.func @transform_5(%arg0: i32) -> (i32, i32) {
    %c0_i32 = arith.constant 0 : i32
    %c0_i32_0 = arith.constant 0 : i32
    %c0_i32_1 = arith.constant 0 : i32
    return %c0_i32, %c0_i32_0 : i32, i32
  }
  func.func @transform_6(%arg0: i32) -> (i32, i32) {
    %c0_i32 = arith.constant 0 : i32
    %c0_i32_0 = arith.constant 0 : i32
    %c0_i32_1 = arith.constant 0 : i32
    return %c0_i32, %c0_i32_0 : i32, i32
  }
  func.func @transform_7(%arg0: i32) -> (i32, i32) {
    %c0_i32 = arith.constant 0 : i32
    %c0_i32_0 = arith.constant 0 : i32
    return %c0_i32, %arg0 : i32, i32
  }
}

</mosaic_0001>

<llo_original>
// kernel: _value_network_forward_impl.1
$region0: #{_value_network_forward_impl.1}
  #allocation0 [shape = 'u32[]', space=smem, size = 0x4, offset = 0x4, fixed_abs, tag = 'smem constant byte address 0x4 - core index']
  #allocation1 [shape = 'u32[144,128]{1,0:T(1,128)}', space=vmem, size = 0x12000, scoped, tag = 'internal scratch']
  #allocation2 [shape = 'f32[1,1]{1,0:T(1,128)S(1)}', space=vmem, size = 0x200, scoped, tag = 'scoped memory for _value_network_forward_impl.1']
  %s0 = inlined_call_operand.vmem [shape: f32[16,16], index: 0, kind: input, shape index: {}]
  %s1 = inlined_call_operand.vmem [shape: f32[64,16], index: 1, kind: input, shape index: {}]
  %s2 = inlined_call_operand.vmem [shape: f32[64,1], index: 2, kind: input, shape index: {}]
  %s3 = inlined_call_operand.vmem [shape: f32[64,64], index: 3, kind: input, shape index: {}]
  %s4 = inlined_call_operand.vmem [shape: f32[64,1], index: 4, kind: input, shape index: {}]
  %s5 = inlined_call_operand.vmem [shape: f32[1,64], index: 5, kind: input, shape index: {}]
  %s6 = inlined_call_operand.<no memory space> [shape: f32[1,1], index: 6, kind: input, shape index: {}]
  %s7 = inlined_call_operand.hbm [shape: f32[1,16], index: 7, kind: output, shape index: {}]
  %s8 = sld [smem:[#allocation0]]
  $region38: #{_value_network_forward_impl.1} parent=0
    _
  %s10 = ssub.s32 1, %s8
  %s11 = scalar_select 0, %s10, %s8
  %v12 = vstv %s6
  %13 = vst [vmem:[#allocation2] sm:$0x1] %v12
  $region1: #{_value_network_forward_impl.1} parent=0
    #allocation3 [shape = 'u8[512]{0}', space=vmem, size = 0x400, scoped, tag = 'output window, operand 0, single buffered']
    #allocation4 [shape = 's32[1]{0}', space=sflag, size = 0x4, scoped, tag = 'scoped memory for _value_network_forward_impl.1']
    %14 = vsyncpa [#allocation4], 0
    // Predicated region
    $region2: #{_value_network_forward_impl.1} parent=1 // pred_check
      _
    $region3: #{_value_network_forward_impl.1} parent=1 // pred_check_branch
      %16 = sbr.rel (0) target = $region5
    $region4: #{_value_network_forward_impl.1} parent=1 // pred_region
      _
    $region5: #{_value_network_forward_impl.1} parent=1 // pred_fallthru
      _
    // Predicated region
    $region6: #{_value_network_forward_impl.1} parent=1 // pred_check
      _
    $region7: #{_value_network_forward_impl.1} parent=1 // pred_check_branch
      %18 = sbr.rel (0) target = $region9
    $region8: #{_value_network_forward_impl.1} parent=1 // pred_region
      _
    $region9: #{_value_network_forward_impl.1} parent=1 // pred_fallthru
      _
    // Predicated region
    $region10: #{_value_network_forward_impl.1} parent=1 // pred_check
      _
    $region11: #{_value_network_forward_impl.1} parent=1 // pred_check_branch
      %20 = sbr.rel (0) target = $region13
    $region12: #{_value_network_forward_impl.1} parent=1 // pred_region
      _
    $region13: #{_value_network_forward_impl.1} parent=1 // pred_fallthru
      _
    // Predicated region
    $region14: #{_value_network_forward_impl.1} parent=1 // pred_check
      _
    $region15: #{_value_network_forward_impl.1} parent=1 // pred_check_branch
      %22 = sbr.rel (0) target = $region17
    $region16: #{_value_network_forward_impl.1} parent=1 // pred_region
      _
    $region17: #{_value_network_forward_impl.1} parent=1 // pred_fallthru
      _
    // Predicated region
    $region18: #{_value_network_forward_impl.1} parent=1 // pred_check
      _
    $region19: #{_value_network_forward_impl.1} parent=1 // pred_check_branch
      %24 = sbr.rel (0) target = $region21
    $region20: #{_value_network_forward_impl.1} parent=1 // pred_region
      _
    $region21: #{_value_network_forward_impl.1} parent=1 // pred_fallthru
      _
    // Predicated region
    $region22: #{_value_network_forward_impl.1} parent=1 // pred_check
      _
    $region23: #{_value_network_forward_impl.1} parent=1 // pred_check_branch
      %26 = sbr.rel (0) target = $region25
    $region24: #{_value_network_forward_impl.1} parent=1 // pred_region
      _
    $region25: #{_value_network_forward_impl.1} parent=1 // pred_fallthru
      _
    // Predicated region
    $region26: #{_value_network_forward_impl.1} parent=1 // pred_check
      _
    $region27: #{_value_network_forward_impl.1} parent=1 // pred_check_branch
      %28 = sbr.rel (0) target = $region29
    $region28: #{_value_network_forward_impl.1} parent=1 // pred_region
      _
    $region29: #{_value_network_forward_impl.1} parent=1 // pred_fallthru
      _
    %v29 = vld [vmem:[%s0] sm:$0xff]
    %v30 = vld [vmem:[%s0 + $0x8] sm:$0xff]
    %v31 = vld [vmem:[%s1] sm:$0xff]
    %v32 = vld [vmem:[%s1 + $0x8] sm:$0xff]
    %v33 = vld [vmem:[%s1 + $0x10] sm:$0xff]
    %v34 = vld [vmem:[%s1 + $0x18] sm:$0xff]
    %v35 = vld [vmem:[%s1 + $0x20] sm:$0xff]
    %v36 = vld [vmem:[%s1 + $0x28] sm:$0xff]
    %v37 = vld [vmem:[%s1 + $0x30] sm:$0xff]
    %v38 = vld [vmem:[%s1 + $0x38] sm:$0xff]
    %v39 = vld [vmem:[%s2] sm:$0xff]
    %v40 = vld [vmem:[%s2 + $0x8] sm:$0xff]
    %v41 = vld [vmem:[%s2 + $0x10] sm:$0xff]
    %v42 = vld [vmem:[%s2 + $0x18] sm:$0xff]
    %v43 = vld [vmem:[%s2 + $0x20] sm:$0xff]
    %v44 = vld [vmem:[%s2 + $0x28] sm:$0xff]
    %v45 = vld [vmem:[%s2 + $0x30] sm:$0xff]
    %v46 = vld [vmem:[%s2 + $0x38] sm:$0xff]
    %48 = vset.pattern.permute.xlu0 0
    %49 = vperm.xlu0 %48, %v39
    %v50 = vpop.permute.xlu0 %49
    %53 = vset.pattern.permute.xlu0 0
    %54 = vperm.xlu0 %53, %v40
    %v55 = vpop.permute.xlu0 %54
    %58 = vset.pattern.permute.xlu0 0
    %59 = vperm.xlu0 %58, %v41
    %v60 = vpop.permute.xlu0 %59
    %63 = vset.pattern.permute.xlu0 0
    %64 = vperm.xlu0 %63, %v42
    %v65 = vpop.permute.xlu0 %64
    %68 = vset.pattern.permute.xlu0 0
    %69 = vperm.xlu0 %68, %v43
    %v70 = vpop.permute.xlu0 %69
    %73 = vset.pattern.permute.xlu0 0
    %74 = vperm.xlu0 %73, %v44
    %v75 = vpop.permute.xlu0 %74
    %78 = vset.pattern.permute.xlu0 0
    %79 = vperm.xlu0 %78, %v45
    %v80 = vpop.permute.xlu0 %79
    %83 = vset.pattern.permute.xlu0 0
    %84 = vperm.xlu0 %83, %v46
    %v85 = vpop.permute.xlu0 %84
    %vm87 = vcmask 130048
    %v89 = vsel %vm87, %v31, 0
    %v92 = vsel %vm87, %v32, 0
    %v95 = vsel %vm87, %v33, 0
    %v98 = vsel %vm87, %v34, 0
    %v101 = vsel %vm87, %v35, 0
    %v104 = vsel %vm87, %v36, 0
    %v107 = vsel %vm87, %v37, 0
    %v110 = vsel %vm87, %v38, 0
    %112 = vmatprep.subr.mxu0 0.0
    %113 = vmatpush1.msra.mxu0 0.0
    %114 = vmatprep.subr.mxu0 0.0
    %115 = vmatpush1.msra.mxu0 0.0
    %116 = vmatprep.subr.mxu0 0.0
    %117 = vmatpush1.msra.mxu0 0.0
    %118 = vmatprep.subr.mxu0 0.0
    %119 = vmatpush1.msra.mxu0 0.0
    %120 = vmatprep.subr.mxu0 0.0
    %121 = vmatpush1.msra.mxu0 0.0
    %122 = vmatprep.subr.mxu0 0.0
    %123 = vmatpush1.msra.mxu0 0.0
    %124 = vmatprep.subr.mxu0 0.0
    %125 = vmatpush1.msra.mxu0 0.0
    %126 = vmatprep.subr.mxu0 0.0
    %127 = vmatpush1.msra.mxu0 0.0
    %128 = vmatprep.subr.mxu0 0.0
    %129 = vmatpush1.msra.mxu0 0.0
    %130 = vmatprep.subr.mxu0 0.0
    %131 = vmatpush1.msra.mxu0 0.0
    %132 = vmatprep.subr.mxu0 0.0
    %133 = vmatpush1.msra.mxu0 0.0
    %134 = vmatprep.subr.mxu0 0.0
    %135 = vmatpush1.msra.mxu0 0.0
    %136 = vmatprep.subr.mxu0 0.0
    %137 = vmatpush1.msra.mxu0 0.0
    %138 = vmatprep.subr.mxu0 0.0
    %139 = vmatpush1.msra.mxu0 0.0
    %140 = vmatprep.subr.mxu0 0.0
    %141 = vmatpush1.msra.mxu0 %v30
    %142 = vmatprep.subr.mxu0 0.0
    %143 = vmatpush1.msra.mxu0 %v29
    %144 = vmatprep.subr.mxu0 0.0
    %145 = vmatpush2.msra.mxu0 0.0
    %146 = vmatprep.subr.mxu0 0.0
    %147 = vmatpush2.msra.mxu0 0.0
    %148 = vmatprep.subr.mxu0 0.0
    %149 = vmatpush2.msra.mxu0 0.0
    %150 = vmatprep.subr.mxu0 0.0
    %151 = vmatpush2.msra.mxu0 0.0
    %152 = vmatprep.subr.mxu0 0.0
    %153 = vmatpush2.msra.mxu0 0.0
    %154 = vmatprep.subr.mxu0 0.0
    %155 = vmatpush2.msra.mxu0 0.0
    %156 = vmatprep.subr.mxu0 0.0
    %157 = vmatpush2.msra.mxu0 0.0
    %158 = vmatprep.subr.mxu0 0.0
    %159 = vmatpush2.msra.mxu0 0.0
    %160 = vmatprep.subr.mxu0 0.0
    %161 = vmatpush2.msra.mxu0 0.0
    %162 = vmatprep.subr.mxu0 0.0
    %163 = vmatpush2.msra.mxu0 0.0
    %164 = vmatprep.subr.mxu0 0.0
    %165 = vmatpush2.msra.mxu0 0.0
    %166 = vmatprep.subr.mxu0 0.0
    %167 = vmatpush2.msra.mxu0 0.0
    %168 = vmatprep.subr.mxu0 0.0
    %169 = vmatpush2.msra.mxu0 0.0
    %170 = vmatprep.subr.mxu0 0.0
    %171 = vmatpush2.msra.mxu0 0.0
    %172 = vmatprep.subr.mxu0 0.0
    %173 = vmatpush2.msra.mxu0 0.0
    %174 = vmatprep.subr.mxu0 0.0
    %175 = vmatpush2.msra.mxu0 0.0
    %176 = vmatprep.mubr.f32.mxu0 0.0
    %177 = vmatmul.mubr.f32.gmra.mxu0 %v89
    %v178 = vpop.f32.mrf.mxu0
    %v179 = vadd.f32 %v50, %v178
    %v180 = vpop.f32.mrf.mxu0
    %181 = vmatprep.mubr.f32.mxu0 0.0
    %182 = vmatmul.mubr.f32.gmra.mxu0 %v92
    %v183 = vpop.f32.mrf.mxu0
    %v184 = vadd.f32 %v55, %v183
    %v185 = vpop.f32.mrf.mxu0
    %186 = vmatprep.mubr.f32.mxu0 0.0
    %187 = vmatmul.mubr.f32.gmra.mxu0 %v95
    %v188 = vpop.f32.mrf.mxu0
    %v189 = vadd.f32 %v60, %v188
    %v190 = vpop.f32.mrf.mxu0
    %191 = vmatprep.mubr.f32.mxu0 0.0
    %192 = vmatmul.mubr.f32.gmra.mxu0 %v98
    %v193 = vpop.f32.mrf.mxu0
    %v194 = vadd.f32 %v65, %v193
    %v195 = vpop.f32.mrf.mxu0
    %196 = vmatprep.mubr.f32.mxu0 0.0
    %197 = vmatmul.mubr.f32.gmra.mxu0 %v101
    %v198 = vpop.f32.mrf.mxu0
    %v199 = vadd.f32 %v70, %v198
    %v200 = vpop.f32.mrf.mxu0
    %201 = vmatprep.mubr.f32.mxu0 0.0
    %202 = vmatmul.mubr.f32.gmra.mxu0 %v104
    %v203 = vpop.f32.mrf.mxu0
    %v204 = vadd.f32 %v75, %v203
    %v205 = vpop.f32.mrf.mxu0
    %206 = vmatprep.mubr.f32.mxu0 0.0
    %207 = vmatmul.mubr.f32.gmra.mxu0 %v107
    %v208 = vpop.f32.mrf.mxu0
    %v209 = vadd.f32 %v80, %v208
    %v210 = vpop.f32.mrf.mxu0
    %211 = vmatprep.mubr.f32.mxu0 0.0
    %212 = vmatmul.mubr.f32.gmra.mxu0 %v110
    %v213 = vpop.f32.mrf.mxu0
    %v214 = vadd.f32 %v85, %v213
    %v215 = vpop.f32.mrf.mxu0
    %216 = vdwg.mxu0
    %v217 = vtanh.pop %v179
    %v218 = vtanh.pop %v184
    %v219 = vtanh.pop %v189
    %v220 = vtanh.pop %v194
    %v221 = vtanh.pop %v199
    %v222 = vtanh.pop %v204
    %v223 = vtanh.pop %v209
    %v224 = vtanh.pop %v214
    %v225 = vld [vmem:[%s3] sm:$0xff]
    %v226 = vld [vmem:[%s3 + $0x8] sm:$0xff]
    %v227 = vld [vmem:[%s3 + $0x10] sm:$0xff]
    %v228 = vld [vmem:[%s3 + $0x18] sm:$0xff]
    %v229 = vld [vmem:[%s3 + $0x20] sm:$0xff]
    %v230 = vld [vmem:[%s3 + $0x28] sm:$0xff]
    %v231 = vld [vmem:[%s3 + $0x30] sm:$0xff]
    %v232 = vld [vmem:[%s3 + $0x38] sm:$0xff]
    %v233 = vld [vmem:[%s4] sm:$0xff]
    %v234 = vld [vmem:[%s4 + $0x8] sm:$0xff]
    %v235 = vld [vmem:[%s4 + $0x10] sm:$0xff]
    %v236 = vld [vmem:[%s4 + $0x18] sm:$0xff]
    %v237 = vld [vmem:[%s4 + $0x20] sm:$0xff]
    %v238 = vld [vmem:[%s4 + $0x28] sm:$0xff]
    %v239 = vld [vmem:[%s4 + $0x30] sm:$0xff]
    %v240 = vld [vmem:[%s4 + $0x38] sm:$0xff]
    %242 = vset.pattern.permute.xlu0 0
    %243 = vperm.xlu0 %242, %v233
    %v244 = vpop.permute.xlu0 %243
    %247 = vset.pattern.permute.xlu0 0
    %248 = vperm.xlu0 %247, %v234
    %v249 = vpop.permute.xlu0 %248
    %252 = vset.pattern.permute.xlu0 0
    %253 = vperm.xlu0 %252, %v235
    %v254 = vpop.permute.xlu0 %253
    %257 = vset.pattern.permute.xlu0 0
    %258 = vperm.xlu0 %257, %v236
    %v259 = vpop.permute.xlu0 %258
    %262 = vset.pattern.permute.xlu0 0
    %263 = vperm.xlu0 %262, %v237
    %v264 = vpop.permute.xlu0 %263
    %267 = vset.pattern.permute.xlu0 0
    %268 = vperm.xlu0 %267, %v238
    %v269 = vpop.permute.xlu0 %268
    %272 = vset.pattern.permute.xlu0 0
    %273 = vperm.xlu0 %272, %v239
    %v274 = vpop.permute.xlu0 %273
    %277 = vset.pattern.permute.xlu0 0
    %278 = vperm.xlu0 %277, %v240
    %v279 = vpop.permute.xlu0 %278
    %vm281 = vcmask 523264
    %v283 = vsel %vm281, %v225, 0
    %v286 = vsel %vm281, %v226, 0
    %v289 = vsel %vm281, %v227, 0
    %v292 = vsel %vm281, %v228, 0
    %v295 = vsel %vm281, %v229, 0
    %v298 = vsel %vm281, %v230, 0
    %v301 = vsel %vm281, %v231, 0
    %v304 = vsel %vm281, %v232, 0
    %306 = vmatprep.subr.mxu0 0.0
    %307 = vmatpush1.msra.mxu0 0.0
    %308 = vmatprep.subr.mxu0 0.0
    %309 = vmatpush1.msra.mxu0 0.0
    %310 = vmatprep.subr.mxu0 0.0
    %311 = vmatpush1.msra.mxu0 0.0
    %312 = vmatprep.subr.mxu0 0.0
    %313 = vmatpush1.msra.mxu0 0.0
    %314 = vmatprep.subr.mxu0 0.0
    %315 = vmatpush1.msra.mxu0 0.0
    %316 = vmatprep.subr.mxu0 0.0
    %317 = vmatpush1.msra.mxu0 0.0
    %318 = vmatprep.subr.mxu0 0.0
    %319 = vmatpush1.msra.mxu0 0.0
    %320 = vmatprep.subr.mxu0 0.0
    %321 = vmatpush1.msra.mxu0 0.0
    %322 = vmatprep.subr.mxu0 0.0
    %323 = vmatpush1.msra.mxu0 %v224
    %324 = vmatprep.subr.mxu0 0.0
    %325 = vmatpush1.msra.mxu0 %v223
    %326 = vmatprep.subr.mxu0 0.0
    %327 = vmatpush1.msra.mxu0 %v222
    %328 = vmatprep.subr.mxu0 0.0
    %329 = vmatpush1.msra.mxu0 %v221
    %330 = vmatprep.subr.mxu0 0.0
    %331 = vmatpush1.msra.mxu0 %v220
    %332 = vmatprep.subr.mxu0 0.0
    %333 = vmatpush1.msra.mxu0 %v219
    %334 = vmatprep.subr.mxu0 0.0
    %335 = vmatpush1.msra.mxu0 %v218
    %336 = vmatprep.subr.mxu0 0.0
    %337 = vmatpush1.msra.mxu0 %v217
    %338 = vmatprep.subr.mxu0 0.0
    %339 = vmatpush2.msra.mxu0 0.0
    %340 = vmatprep.subr.mxu0 0.0
    %341 = vmatpush2.msra.mxu0 0.0
    %342 = vmatprep.subr.mxu0 0.0
    %343 = vmatpush2.msra.mxu0 0.0
    %344 = vmatprep.subr.mxu0 0.0
    %345 = vmatpush2.msra.mxu0 0.0
    %346 = vmatprep.subr.mxu0 0.0
    %347 = vmatpush2.msra.mxu0 0.0
    %348 = vmatprep.subr.mxu0 0.0
    %349 = vmatpush2.msra.mxu0 0.0
    %350 = vmatprep.subr.mxu0 0.0
    %351 = vmatpush2.msra.mxu0 0.0
    %352 = vmatprep.subr.mxu0 0.0
    %353 = vmatpush2.msra.mxu0 0.0
    %354 = vmatprep.subr.mxu0 0.0
    %355 = vmatpush2.msra.mxu0 0.0
    %356 = vmatprep.subr.mxu0 0.0
    %357 = vmatpush2.msra.mxu0 0.0
    %358 = vmatprep.subr.mxu0 0.0
    %359 = vmatpush2.msra.mxu0 0.0
    %360 = vmatprep.subr.mxu0 0.0
    %361 = vmatpush2.msra.mxu0 0.0
    %362 = vmatprep.subr.mxu0 0.0
    %363 = vmatpush2.msra.mxu0 0.0
    %364 = vmatprep.subr.mxu0 0.0
    %365 = vmatpush2.msra.mxu0 0.0
    %366 = vmatprep.subr.mxu0 0.0
    %367 = vmatpush2.msra.mxu0 0.0
    %368 = vmatprep.subr.mxu0 0.0
    %369 = vmatpush2.msra.mxu0 0.0
    %370 = vmatprep.mubr.f32.mxu0 0.0
    %371 = vmatmul.mubr.f32.gmra.mxu0 %v283
    %v372 = vpop.f32.mrf.mxu0
    %v373 = vadd.f32 %v244, %v372
    %v374 = vpop.f32.mrf.mxu0
    %375 = vmatprep.mubr.f32.mxu0 0.0
    %376 = vmatmul.mubr.f32.gmra.mxu0 %v286
    %v377 = vpop.f32.mrf.mxu0
    %v378 = vadd.f32 %v249, %v377
    %v379 = vpop.f32.mrf.mxu0
    %380 = vmatprep.mubr.f32.mxu0 0.0
    %381 = vmatmul.mubr.f32.gmra.mxu0 %v289
    %v382 = vpop.f32.mrf.mxu0
    %v383 = vadd.f32 %v254, %v382
    %v384 = vpop.f32.mrf.mxu0
    %385 = vmatprep.mubr.f32.mxu0 0.0
    %386 = vmatmul.mubr.f32.gmra.mxu0 %v292
    %v387 = vpop.f32.mrf.mxu0
    %v388 = vadd.f32 %v259, %v387
    %v389 = vpop.f32.mrf.mxu0
    %390 = vmatprep.mubr.f32.mxu0 0.0
    %391 = vmatmul.mubr.f32.gmra.mxu0 %v295
    %v392 = vpop.f32.mrf.mxu0
    %v393 = vadd.f32 %v264, %v392
    %v394 = vpop.f32.mrf.mxu0
    %395 = vmatprep.mubr.f32.mxu0 0.0
    %396 = vmatmul.mubr.f32.gmra.mxu0 %v298
    %v397 = vpop.f32.mrf.mxu0
    %v398 = vadd.f32 %v269, %v397
    %v399 = vpop.f32.mrf.mxu0
    %400 = vmatprep.mubr.f32.mxu0 0.0
    %401 = vmatmul.mubr.f32.gmra.mxu0 %v301
    %v402 = vpop.f32.mrf.mxu0
    %v403 = vadd.f32 %v274, %v402
    %v404 = vpop.f32.mrf.mxu0
    %405 = vmatprep.mubr.f32.mxu0 0.0
    %406 = vmatmul.mubr.f32.gmra.mxu0 %v304
    %v407 = vpop.f32.mrf.mxu0
    %v408 = vadd.f32 %v279, %v407
    %v409 = vpop.f32.mrf.mxu0
    %410 = vdwg.mxu0
    %v411 = vtanh.pop %v373
    %v412 = vtanh.pop %v378
    %v413 = vtanh.pop %v383
    %v414 = vtanh.pop %v388
    %v415 = vtanh.pop %v393
    %v416 = vtanh.pop %v398
    %v417 = vtanh.pop %v403
    %v418 = vtanh.pop %v408
    %v419 = vld [vmem:[%s5] sm:$0x1]
    %v420 = vld [vmem:[#allocation2] sm:$0x1]
    %422 = vset.pattern.permute.xlu0 0
    %423 = vperm.xlu0 %422, %v420
    %v424 = vpop.permute.xlu0 %423
    %v426 = vlaneseq
    %v427 = vshrl.u32 %v426, 7
    %v428 = vsub.s32 0, %v427
    %v429 = vrot.slane %v424, %v428
    %v431 = vsel %vm281, %v419, 0
    %433 = vmatprep.subr.mxu0 0.0
    %434 = vmatpush1.msra.mxu0 0.0
    %435 = vmatprep.subr.mxu0 0.0
    %436 = vmatpush1.msra.mxu0 0.0
    %437 = vmatprep.subr.mxu0 0.0
    %438 = vmatpush1.msra.mxu0 0.0
    %439 = vmatprep.subr.mxu0 0.0
    %440 = vmatpush1.msra.mxu0 0.0
    %441 = vmatprep.subr.mxu0 0.0
    %442 = vmatpush1.msra.mxu0 0.0
    %443 = vmatprep.subr.mxu0 0.0
    %444 = vmatpush1.msra.mxu0 0.0
    %445 = vmatprep.subr.mxu0 0.0
    %446 = vmatpush1.msra.mxu0 0.0
    %447 = vmatprep.subr.mxu0 0.0
    %448 = vmatpush1.msra.mxu0 0.0
    %449 = vmatprep.subr.mxu0 0.0
    %450 = vmatpush1.msra.mxu0 %v418
    %451 = vmatprep.subr.mxu0 0.0
    %452 = vmatpush1.msra.mxu0 %v417
    %453 = vmatprep.subr.mxu0 0.0
    %454 = vmatpush1.msra.mxu0 %v416
    %455 = vmatprep.subr.mxu0 0.0
    %456 = vmatpush1.msra.mxu0 %v415
    %457 = vmatprep.subr.mxu0 0.0
    %458 = vmatpush1.msra.mxu0 %v414
    %459 = vmatprep.subr.mxu0 0.0
    %460 = vmatpush1.msra.mxu0 %v413
    %461 = vmatprep.subr.mxu0 0.0
    %462 = vmatpush1.msra.mxu0 %v412
    %463 = vmatprep.subr.mxu0 0.0
    %464 = vmatpush1.msra.mxu0 %v411
    %465 = vmatprep.subr.mxu0 0.0
    %466 = vmatpush2.msra.mxu0 0.0
    %467 = vmatprep.subr.mxu0 0.0
    %468 = vmatpush2.msra.mxu0 0.0
    %469 = vmatprep.subr.mxu0 0.0
    %470 = vmatpush2.msra.mxu0 0.0
    %471 = vmatprep.subr.mxu0 0.0
    %472 = vmatpush2.msra.mxu0 0.0
    %473 = vmatprep.subr.mxu0 0.0
    %474 = vmatpush2.msra.mxu0 0.0
    %475 = vmatprep.subr.mxu0 0.0
    %476 = vmatpush2.msra.mxu0 0.0
    %477 = vmatprep.subr.mxu0 0.0
    %478 = vmatpush2.msra.mxu0 0.0
    %479 = vmatprep.subr.mxu0 0.0
    %480 = vmatpush2.msra.mxu0 0.0
    %481 = vmatprep.subr.mxu0 0.0
    %482 = vmatpush2.msra.mxu0 0.0
    %483 = vmatprep.subr.mxu0 0.0
    %484 = vmatpush2.msra.mxu0 0.0
    %485 = vmatprep.subr.mxu0 0.0
    %486 = vmatpush2.msra.mxu0 0.0
    %487 = vmatprep.subr.mxu0 0.0
    %488 = vmatpush2.msra.mxu0 0.0
    %489 = vmatprep.subr.mxu0 0.0
    %490 = vmatpush2.msra.mxu0 0.0
    %491 = vmatprep.subr.mxu0 0.0
    %492 = vmatpush2.msra.mxu0 0.0
    %493 = vmatprep.subr.mxu0 0.0
    %494 = vmatpush2.msra.mxu0 0.0
    %495 = vmatprep.subr.mxu0 0.0
    %496 = vmatpush2.msra.mxu0 0.0
    %497 = vmatprep.mubr.f32.mxu0 0.0
    %498 = vmatmul.mubr.f32.gmra.mxu0 %v431
    %v499 = vpop.f32.mrf.mxu0
    %v500 = vadd.f32 %v429, %v499
    %v501 = vpop.f32.mrf.mxu0
    %502 = vdwg.mxu0
    %vm503 = vcmp.gt.f32.partialorder %v500, 0.0
    %v504 = vmul.f32 %v500, 0.01
    %v505 = vsel %vm503, %v500, %v504
    %vm506 = vcmask 122880
    %507 = vst.msk [vmem:[#allocation3] sm:$0x1] %vm506, %v505
    // Predicated region
    $region30: #{_value_network_forward_impl.1} parent=1 // pred_check
      _
    $region31: #{_value_network_forward_impl.1} parent=1 // pred_check_branch
      %509 = sbr.rel (0) target = $region33
    $region32: #{_value_network_forward_impl.1} parent=1 // pred_region
      %s511 = ssub.s32 16, 16
      %512 = vsyncadd [#allocation4], %s511
      %s514 = sshll.u32 [#allocation3], 4
      %s515 = int_to_ptr.vmem [resolvable:$true] %s514
      %517 = dma.vmem_to_hbm [thread:$0]  %s515, 16, %s7, [#allocation4]
    $region33: #{_value_network_forward_impl.1} parent=1 // pred_fallthru
      _
    // Predicated region
    $region34: #{_value_network_forward_impl.1} parent=1 // pred_check
      _
    $region35: #{_value_network_forward_impl.1} parent=1 // pred_check_branch
      %519 = sbr.rel (0) target = $region37
    $region36: #{_value_network_forward_impl.1} parent=1 // pred_region
      %520 = dma.done [#allocation4], 16
    $region37: #{_value_network_forward_impl.1} parent=1 // pred_fallthru
      _
    %521 = vsyncpa [#allocation4], 1

</llo_original>
